<compile_context>
chip_gen: v6e
topology: v6e:2x2x1
jax: 0.10.0
libtpu: 0.0.40
codegen_flags: <defaults>
</compile_context>

<pallas_src>
import functools

import jax
import jax.numpy as jnp
from jax.experimental import pallas as pl
from jax.experimental.pallas import tpu as pltpu


def _spatial_attention_kernel(x_ref, wqkv_ref, wp_ref, bp_ref, o_ref):
    # x_ref:    (Bb, T, N)  input block (f32)
    # wqkv_ref: (N, 3N)     [Wq^T | Wk^T | Wv^T]   (compute dtype)
    # wp_ref:   (N, N)      Wproj^T                (compute dtype)
    # bp_ref:   (1, N)      proj bias              (f32)
    # o_ref:    (Bb, T*N) lane-dense slab, or (Bb, T, N)
    bb, t, n = x_ref.shape
    cdt = wqkv_ref.dtype                      # MXU operand dtype (f32 or bf16)
    scale = jnp.float32(n) ** jnp.float32(-0.5)

    # Merge batch and time: (Bb*T, N).  Minor dim unchanged -> cheap relayout.
    x2 = x_ref[...].reshape(bb * t, n).astype(cdt)

    # Fused Q/K/V projection: one MXU pass, f32 accumulation.
    qkv = jnp.dot(x2, wqkv_ref[...], preferred_element_type=jnp.float32)
    q = qkv[:, :n].reshape(bb, t, n)
    k = qkv[:, n:2 * n].reshape(bb, t, n)
    v = qkv[:, 2 * n:].reshape(bb, t, n)

    # Per-batch node-node attention scores:
    #   attn[b, m, n'] = sum_t q[b, t, m] * k[b, t, n'] * N^{-0.5}
    attn = jnp.einsum('btm,btn->bmn', q.astype(cdt), k.astype(cdt),
                      preferred_element_type=jnp.float32) * scale

    # Numerically stable softmax over the key-node axis, f32 math; the
    # normalisation uses the EUP approximate reciprocal (frees VPU cycles).
    attn_max = jnp.max(attn, axis=-1, keepdims=True)
    p = jnp.exp(attn - attn_max)
    denom = jnp.sum(p, axis=-1, keepdims=True)
    attn = p * pl.reciprocal(denom, approx=True)

    # Value mix: p_x[b, t, m] = sum_n' attn[b, m, n'] * v[b, t, n'].
    # TODO(synk): if N is ever scaled to >=128 nodes, compute attn already
    # transposed so this contraction does not relayout attn's lane dim.
    p_x = jnp.einsum('btn,bmn->btm', v.astype(cdt), attn.astype(cdt),
                     preferred_element_type=jnp.float32)

    # Final Linear(N, N): (Bb*T, N) @ (N, N) + bias, f32 accumulation.
    p_x2 = p_x.reshape(bb * t, n).astype(cdt)
    out = jnp.dot(p_x2, wp_ref[...], preferred_element_type=jnp.float32)
    out = out + bp_ref[...].astype(jnp.float32)

    if len(o_ref.shape) == 2:
        # Lane-dense (Bb, T*N) slab: pack the T time-slices along the lane axis
        # (row-major over (T, N), matching the HBM layout of (B, T, N)).
        out3 = out.reshape(bb, t, n)
        flat = jnp.concatenate([out3[:, i, :] for i in range(t)], axis=-1)
        o_ref[...] = flat.astype(o_ref.dtype)
    else:
        o_ref[...] = out.reshape(bb, t, n).astype(o_ref.dtype)


def _choose_block_batch(B, T, target_rows=256):
    """Pick Bb (a divisor of B) so each grid step feeds ~target_rows MXU rows."""
    bb = max(1, min(B, target_rows // max(T, 1)))
    while B % bb:
        bb -= 1
    # Prefer >=2 grid steps (v7x shards "parallel" axes over 2 TensorCores) as
    # long as each step still carries >=128 matmul rows.
    if B // bb < 2:
        for cand in range(bb - 1, 0, -1):
            if B % cand == 0 and cand * T >= 128 and B // cand >= 2:
                bb = cand
                break
    return bb


@functools.partial(jax.jit, static_argnames=("compute_dtype", "block_b"))
def spatial_attention(x, w_q, w_k, w_v, w_proj, b_proj, *,
                      compute_dtype=jnp.float32, block_b=None):
    """x: (B, T, N); w_*: (N, N) in PyTorch (out, in) convention; b_proj: (N,).

    compute_dtype: dtype of the MXU operands (jnp.bfloat16 recommended on
    v6e / v7x); softmax and accumulation always run in float32.
    """
    B, T, N = x.shape
    cdt = jnp.dtype(compute_dtype)

    # Weight prep (glue): transpose so kernel matmuls are plain `x @ W^T`, and
    # fuse Q/K/V into a single (N, 3N) operand.
    wqkv_t = jnp.concatenate(
        [jnp.transpose(w_q), jnp.transpose(w_k), jnp.transpose(w_v)],
        axis=1).astype(cdt)
    wp_t = jnp.transpose(w_proj).astype(cdt)
    bp = b_proj.reshape(1, N).astype(jnp.float32)

    bb = _choose_block_batch(B, T) if block_b is None else block_b
    assert B % bb == 0, "block_b must divide the batch size"

    # Lane-dense output slab when T*N fills whole 128-lane vregs and the
    # block's sublane dim (bb) is layout friendly; the reshape back outside the
    # kernel is free (identical HBM bytes / layout).
    flat_tn = T * N
    flatten_out = (flat_tn % 128 == 0) and (bb == B or bb % 8 == 0)
    if flatten_out:
        out_shape = jax.ShapeDtypeStruct((B, flat_tn), x.dtype)
        out_spec = pl.BlockSpec((bb, flat_tn), lambda b: (b, 0))
    else:
        out_shape = jax.ShapeDtypeStruct((B, T, N), x.dtype)
        out_spec = pl.BlockSpec((bb, T, N), lambda b: (b, 0, 0))

    out = pl.pallas_call(
        _spatial_attention_kernel,
        out_shape=out_shape,
        grid_spec=pltpu.PrefetchScalarGridSpec(
            num_scalar_prefetch=0,
            grid=(B // bb,),
            in_specs=[
                pl.BlockSpec((bb, T, N), lambda b: (b, 0, 0)),   # x block
                pl.BlockSpec((N, 3 * N), lambda b: (0, 0)),      # [Wq|Wk|Wv]^T
                pl.BlockSpec((N, N), lambda b: (0, 0)),          # Wproj^T
                pl.BlockSpec((1, N), lambda b: (0, 0)),          # proj bias
            ],
            out_specs=out_spec,
        ),
        compiler_params=pltpu.CompilerParams(
            dimension_semantics=("parallel",)),
    )(x, wqkv_t, wp_t, bp)

    if flatten_out:
        out = out.reshape(B, T, N)
    return out


def spatial_attention_ref(x, w_q, w_k, w_v, w_proj, b_proj):
    """Pure-JAX reference mirroring the PyTorch forward exactly."""
    B, T, N = x.shape
    xt = jnp.swapaxes(x, -1, -2)                      # (B, N, T)
    s_q = jnp.einsum('oi,bit->bot', w_q, xt)          # Conv1d k=1, no bias
    s_k = jnp.einsum('oi,bit->bot', w_k, xt)
    s_v = jnp.einsum('oi,bit->bot', w_v, xt)
    s_attn = (s_q @ jnp.swapaxes(s_k, -1, -2)) * (N ** -0.5)
    s_attn = jax.nn.softmax(s_attn, axis=-1)
    p_x = jnp.swapaxes(s_attn @ s_v, -1, -2)          # (B, T, N)
    return p_x @ w_proj.T + b_proj


if __name__ == "__main__":
    # config: num_nodes=N, qkv_bias=False (default), attn_drop=proj_drop=0.0
    B, T, N = 2, 8, 16     # T*N == 128 -> exercises the lane-dense output path

    key = jax.random.PRNGKey(0)
    kx, kq, kk, kv, kp, kb = jax.random.split(key, 6)

    x = jax.random.normal(kx, (B, T, N), dtype=jnp.float32)
    # Deterministic synthetic parameters (shapes from the module __init__):
    #   Conv1d(N, N, 1) weights -> (N, N); Linear(N, N) -> (N, N) + (N,)
    w_q = jax.random.normal(kq, (N, N), dtype=jnp.float32) * (N ** -0.5)
    w_k = jax.random.normal(kk, (N, N), dtype=jnp.float32) * (N ** -0.5)
    w_v = jax.random.normal(kv, (N, N), dtype=jnp.float32) * (N ** -0.5)
    w_proj = jax.random.normal(kp, (N, N), dtype=jnp.float32) * (N ** -0.5)
    b_proj = jax.random.normal(kb, (N,), dtype=jnp.float32) * 0.01

    ref = spatial_attention_ref(x, w_q, w_k, w_v, w_proj, b_proj)

    # Default f32 MXU operands (safe on v5e; exact apart from the EUP recip).
    out = jax.block_until_ready(
        spatial_attention(x, w_q, w_k, w_v, w_proj, b_proj))
    assert out.shape == (B, T, N)
    assert jnp.allclose(out, ref, atol=5e-3, rtol=5e-3), "f32 kernel mismatch"

    # bf16 MXU operands (v6e / v7x fast path); accumulation stays f32.
    out_bf16 = jax.block_until_ready(
        spatial_attention(x, w_q, w_k, w_v, w_proj, b_proj,
                          compute_dtype=jnp.bfloat16))
    assert out_bf16.shape == (B, T, N)
    assert jnp.allclose(out_bf16, ref, atol=5e-2, rtol=5e-2), "bf16 kernel mismatch"

    # Multi-step grid + 3-D (non-flattened) output path: B=4, block_b=2.
    B2 = 4
    x2 = jax.random.normal(jax.random.PRNGKey(1), (B2, T, N), dtype=jnp.float32)
    ref2 = spatial_attention_ref(x2, w_q, w_k, w_v, w_proj, b_proj)
    out2 = jax.block_until_ready(
        spatial_attention(x2, w_q, w_k, w_v, w_proj, b_proj, block_b=2))
    assert out2.shape == (B2, T, N)
    assert jnp.allclose(out2, ref2, atol=5e-3, rtol=5e-3), "grid>1 kernel mismatch"

    print("KERNEL_OK")
</pallas_src>

<mosaic_0001>
module attributes {stable_mosaic.version = 11 : i64} {
  func.func @_spatial_attention_kernel(%arg0: i32, %arg1: memref<2x8x16xf32, #tpu.memory_space<vmem>>, %arg2: memref<16x48xf32, #tpu.memory_space<vmem>>, %arg3: memref<16x16xf32, #tpu.memory_space<vmem>>, %arg4: memref<1x16xf32, #tpu.memory_space<vmem>>, %arg5: memref<2x128xf32, #tpu.memory_space<vmem>>) attributes {dimension_semantics = [#tpu.dimension_semantics<parallel>], iteration_bounds = array<i64: 1>, scalar_prefetch = 0 : i64, scratch_operands = 0 : i64, tpu.core_type = #tpu.core_type<tc>, window_params = [{transform_indices = @transform_0, window_bounds = array<i64: 2, 8, 16>}, {pipeline_mode = #tpu.pipeline_mode<synchronous>, transform_indices = @transform_1, window_bounds = array<i64: 16, 48>}, {pipeline_mode = #tpu.pipeline_mode<synchronous>, transform_indices = @transform_2, window_bounds = array<i64: 16, 16>}, {pipeline_mode = #tpu.pipeline_mode<synchronous>, transform_indices = @transform_3, window_bounds = array<i64: 1, 16>}, {transform_indices = @transform_4, window_bounds = array<i64: 2, 128>}]} {
    %cst = arith.constant 1.600000e+01 : f32
    %cst_0 = arith.constant -5.000000e-01 : f32
    %0 = math.powf %cst, %cst_0 : f32
    %c0 = arith.constant 0 : index
    %c0_1 = arith.constant 0 : index
    %c0_2 = arith.constant 0 : index
    %1 = vector.load %arg1[%c0, %c0_1, %c0_2] : memref<2x8x16xf32, #tpu.memory_space<vmem>>, vector<2x8x16xf32>
    %2 = vector.shape_cast %1 : vector<2x8x16xf32> to vector<16x16xf32>
    %c0_3 = arith.constant 0 : index
    %c0_4 = arith.constant 0 : index
    %3 = vector.load %arg2[%c0_3, %c0_4] : memref<16x48xf32, #tpu.memory_space<vmem>>, vector<16x48xf32>
    %cst_5 = arith.constant dense<0.000000e+00> : vector<16x48xf32>
    %4 = tpu.matmul %2, %3, %cst_5 {dimension_numbers = #tpu.dot_dimension_numbers<[1], [0], [0], [1], [0, 0, 1, 1], [], []>} : vector<16x16xf32>, vector<16x48xf32>, vector<16x48xf32> -> vector<16x48xf32>
    %5 = vector.extract_strided_slice %4 {offsets = [0, 0], sizes = [16, 16], strides = [1, 1]} : vector<16x48xf32> to vector<16x16xf32>
    %6 = vector.shape_cast %5 : vector<16x16xf32> to vector<2x8x16xf32>
    %7 = vector.extract_strided_slice %4 {offsets = [0, 16], sizes = [16, 16], strides = [1, 1]} : vector<16x48xf32> to vector<16x16xf32>
    %8 = vector.shape_cast %7 : vector<16x16xf32> to vector<2x8x16xf32>
    %9 = vector.extract_strided_slice %4 {offsets = [0, 32], sizes = [16, 16], strides = [1, 1]} : vector<16x48xf32> to vector<16x16xf32>
    %10 = vector.shape_cast %9 : vector<16x16xf32> to vector<2x8x16xf32>
    "tpu.trace_start"() <{level = 10 : i32, message = "btm,btn->bmn"}> : () -> ()
    %cst_6 = arith.constant dense<0.000000e+00> : vector<2x16x16xf32>
    %11 = tpu.matmul %6, %8, %cst_6 {dimension_numbers = #tpu.dot_dimension_numbers<[1], [1], [2], [2], [0, 0, 0, 2, 1, 2], [0], [0]>} : vector<2x8x16xf32>, vector<2x8x16xf32>, vector<2x16x16xf32> -> vector<2x16x16xf32>
    "tpu.trace_stop"() : () -> ()
    %12 = vector.broadcast %0 : f32 to vector<2x16x16xf32>
    %13 = arith.mulf %11, %12 : vector<2x16x16xf32>
    %cst_7 = arith.constant dense<0xFF800000> : vector<2x16xf32>
    %14 = vector.multi_reduction <maximumf>, %13, %cst_7 [2] : vector<2x16x16xf32> to vector<2x16xf32>
    %15 = vector.shape_cast %14 : vector<2x16xf32> to vector<2x16x1xf32>
    %16 = vector.broadcast %15 : vector<2x16x1xf32> to vector<2x16x16xf32>
    %17 = arith.subf %13, %16 : vector<2x16x16xf32>
    %18 = math.exp %17 : vector<2x16x16xf32>
    %cst_8 = arith.constant dense<0.000000e+00> : vector<2x16xf32>
    %19 = vector.multi_reduction <add>, %18, %cst_8 [2] : vector<2x16x16xf32> to vector<2x16xf32>
    %20 = vector.shape_cast %19 : vector<2x16xf32> to vector<2x16x1xf32>
    %21 = tpu.reciprocal %20 {approx = true} : vector<2x16x1xf32> -> vector<2x16x1xf32>
    %22 = vector.broadcast %21 : vector<2x16x1xf32> to vector<2x16x16xf32>
    %23 = arith.mulf %18, %22 : vector<2x16x16xf32>
    "tpu.trace_start"() <{level = 10 : i32, message = "btn,bmn->btm"}> : () -> ()
    %cst_9 = arith.constant dense<0.000000e+00> : vector<2x8x16xf32>
    %24 = tpu.matmul %10, %23, %cst_9 {dimension_numbers = #tpu.dot_dimension_numbers<[2], [2], [1], [1], [0, 0, 0, 1, 1, 1], [0], [0]>} : vector<2x8x16xf32>, vector<2x16x16xf32>, vector<2x8x16xf32> -> vector<2x8x16xf32>
    "tpu.trace_stop"() : () -> ()
    %25 = vector.shape_cast %24 : vector<2x8x16xf32> to vector<16x16xf32>
    %c0_10 = arith.constant 0 : index
    %c0_11 = arith.constant 0 : index
    %26 = vector.load %arg3[%c0_10, %c0_11] : memref<16x16xf32, #tpu.memory_space<vmem>>, vector<16x16xf32>
    %cst_12 = arith.constant dense<0.000000e+00> : vector<16x16xf32>
    %27 = tpu.matmul %25, %26, %cst_12 {dimension_numbers = #tpu.dot_dimension_numbers<[1], [0], [0], [1], [0, 0, 1, 1], [], []>} : vector<16x16xf32>, vector<16x16xf32>, vector<16x16xf32> -> vector<16x16xf32>
    %c0_13 = arith.constant 0 : index
    %c0_14 = arith.constant 0 : index
    %28 = vector.load %arg4[%c0_13, %c0_14] : memref<1x16xf32, #tpu.memory_space<vmem>>, vector<1x16xf32>
    %29 = vector.broadcast %28 : vector<1x16xf32> to vector<16x16xf32>
    %30 = arith.addf %27, %29 : vector<16x16xf32>
    %31 = vector.shape_cast %30 : vector<16x16xf32> to vector<2x8x16xf32>
    %32 = vector.extract_strided_slice %31 {offsets = [0, 0, 0], sizes = [2, 1, 16], strides = [1, 1, 1]} : vector<2x8x16xf32> to vector<2x1x16xf32>
    %33 = vector.shape_cast %32 : vector<2x1x16xf32> to vector<2x16xf32>
    %34 = vector.extract_strided_slice %31 {offsets = [0, 1, 0], sizes = [2, 1, 16], strides = [1, 1, 1]} : vector<2x8x16xf32> to vector<2x1x16xf32>
    %35 = vector.shape_cast %34 : vector<2x1x16xf32> to vector<2x16xf32>
    %36 = vector.extract_strided_slice %31 {offsets = [0, 2, 0], sizes = [2, 1, 16], strides = [1, 1, 1]} : vector<2x8x16xf32> to vector<2x1x16xf32>
    %37 = vector.shape_cast %36 : vector<2x1x16xf32> to vector<2x16xf32>
    %38 = vector.extract_strided_slice %31 {offsets = [0, 3, 0], sizes = [2, 1, 16], strides = [1, 1, 1]} : vector<2x8x16xf32> to vector<2x1x16xf32>
    %39 = vector.shape_cast %38 : vector<2x1x16xf32> to vector<2x16xf32>
    %40 = vector.extract_strided_slice %31 {offsets = [0, 4, 0], sizes = [2, 1, 16], strides = [1, 1, 1]} : vector<2x8x16xf32> to vector<2x1x16xf32>
    %41 = vector.shape_cast %40 : vector<2x1x16xf32> to vector<2x16xf32>
    %42 = vector.extract_strided_slice %31 {offsets = [0, 5, 0], sizes = [2, 1, 16], strides = [1, 1, 1]} : vector<2x8x16xf32> to vector<2x1x16xf32>
    %43 = vector.shape_cast %42 : vector<2x1x16xf32> to vector<2x16xf32>
    %44 = vector.extract_strided_slice %31 {offsets = [0, 6, 0], sizes = [2, 1, 16], strides = [1, 1, 1]} : vector<2x8x16xf32> to vector<2x1x16xf32>
    %45 = vector.shape_cast %44 : vector<2x1x16xf32> to vector<2x16xf32>
    %46 = vector.extract_strided_slice %31 {offsets = [0, 7, 0], sizes = [2, 1, 16], strides = [1, 1, 1]} : vector<2x8x16xf32> to vector<2x1x16xf32>
    %47 = vector.shape_cast %46 : vector<2x1x16xf32> to vector<2x16xf32>
    %48 = tpu.concatenate %33, %35, %37, %39, %41, %43, %45, %47 in 1 : vector<2x16xf32>, vector<2x16xf32>, vector<2x16xf32>, vector<2x16xf32>, vector<2x16xf32>, vector<2x16xf32>, vector<2x16xf32>, vector<2x16xf32> -> vector<2x128xf32>
    %c0_15 = arith.constant 0 : index
    %c0_16 = arith.constant 0 : index
    %49 = vector.load %arg5[%c0_15, %c0_16] : memref<2x128xf32, #tpu.memory_space<vmem>>, vector<2x128xf32>
    tpu.vector_store %arg5[%c0_15, %c0_16], %48 {strides = array<i32>} : memref<2x128xf32, #tpu.memory_space<vmem>>, vector<2x128xf32>,
    return
  }
  func.func @transform_0(%arg0: i32) -> (i32, i32, i32) {
    %c0_i32 = arith.constant 0 : i32
    %c0_i32_0 = arith.constant 0 : i32
    %c0_i32_1 = arith.constant 0 : i32
    return %arg0, %c0_i32, %c0_i32_0 : i32, i32, i32
  }
  func.func @transform_1(%arg0: i32) -> (i32, i32) {
    %c0_i32 = arith.constant 0 : i32
    %c0_i32_0 = arith.constant 0 : i32
    %c0_i32_1 = arith.constant 0 : i32
    return %c0_i32, %c0_i32_0 : i32, i32
  }
  func.func @transform_2(%arg0: i32) -> (i32, i32) {
    %c0_i32 = arith.constant 0 : i32
    %c0_i32_0 = arith.constant 0 : i32
    %c0_i32_1 = arith.constant 0 : i32
    return %c0_i32, %c0_i32_0 : i32, i32
  }
  func.func @transform_3(%arg0: i32) -> (i32, i32) {
    %c0_i32 = arith.constant 0 : i32
    %c0_i32_0 = arith.constant 0 : i32
    %c0_i32_1 = arith.constant 0 : i32
    return %c0_i32, %c0_i32_0 : i32, i32
  }
  func.func @transform_4(%arg0: i32) -> (i32, i32) {
    %c0_i32 = arith.constant 0 : i32
    %c0_i32_0 = arith.constant 0 : i32
    return %arg0, %c0_i32 : i32, i32
  }
}

</mosaic_0001>

<llo_original>
// kernel: spatial_attention.1
$region0: #{spatial_attention.1}
  #allocation0 [shape = 'u32[]', space=smem, size = 0x4, offset = 0x4, fixed_abs, tag = 'smem constant byte address 0x4 - core index']
  #allocation1 [shape = 'u32[144,128]{1,0:T(1,128)}', space=vmem, size = 0x12000, scoped, tag = 'internal scratch']
  %s0 = inlined_call_operand.vmem [shape: f32[2,8,16], index: 0, kind: input, shape index: {}]
  %s1 = inlined_call_operand.vmem [shape: f32[16,48], index: 1, kind: input, shape index: {}]
  %s2 = inlined_call_operand.vmem [shape: f32[16,16], index: 2, kind: input, shape index: {}]
  %s3 = inlined_call_operand.vmem [shape: f32[1,16], index: 3, kind: input, shape index: {}]
  %s4 = inlined_call_operand.vmem [shape: f32[2,128], index: 4, kind: output, shape index: {}]
  %s5 = sld [smem:[#allocation0]]
  $region26: #{spatial_attention.1} parent=0
    _
  %s7 = ssub.s32 1, %s5
  %s8 = scalar_select 0, %s7, %s5
  // Predicated region
  $region2: #{spatial_attention.1} parent=0 // pred_check
    _
  $region3: #{spatial_attention.1} parent=0 // pred_check_branch
    %10 = sbr.rel (0) target = $region5
  $region4: #{spatial_attention.1} parent=0 // pred_region
    _
  $region5: #{spatial_attention.1} parent=0 // pred_fallthru
    _
  // Predicated region
  $region6: #{spatial_attention.1} parent=0 // pred_check
    _
  $region7: #{spatial_attention.1} parent=0 // pred_check_branch
    %12 = sbr.rel (0) target = $region9
  $region8: #{spatial_attention.1} parent=0 // pred_region
    _
  $region9: #{spatial_attention.1} parent=0 // pred_fallthru
    _
  // Predicated region
  $region10: #{spatial_attention.1} parent=0 // pred_check
    _
  $region11: #{spatial_attention.1} parent=0 // pred_check_branch
    %14 = sbr.rel (0) target = $region13
  $region12: #{spatial_attention.1} parent=0 // pred_region
    _
  $region13: #{spatial_attention.1} parent=0 // pred_fallthru
    _
  // Predicated region
  $region14: #{spatial_attention.1} parent=0 // pred_check
    _
  $region15: #{spatial_attention.1} parent=0 // pred_check_branch
    %16 = sbr.rel (0) target = $region17
  $region16: #{spatial_attention.1} parent=0 // pred_region
    _
  $region17: #{spatial_attention.1} parent=0 // pred_fallthru
    _
  %v17 = vld [vmem:[%s0] sm:$0xff]
  %v18 = vld [vmem:[%s0 + $0x8] sm:$0xff]
  %v19 = vld [vmem:[%s1] sm:$0xff]
  %v20 = vld [vmem:[%s1 + $0x8] sm:$0xff]
  %vm21 = vcmask 130048
  %v23 = vsel %vm21, %v17, 0
  %v26 = vsel %vm21, %v18, 0
  %28 = vmatprep.subr.mxu0 0.0
  %29 = vmatpush1.msra.mxu0 0.0
  %30 = vmatprep.subr.mxu0 0.0
  %31 = vmatpush1.msra.mxu0 0.0
  %32 = vmatprep.subr.mxu0 0.0
  %33 = vmatpush1.msra.mxu0 0.0
  %34 = vmatprep.subr.mxu0 0.0
  %35 = vmatpush1.msra.mxu0 0.0
  %36 = vmatprep.subr.mxu0 0.0
  %37 = vmatpush1.msra.mxu0 0.0
  %38 = vmatprep.subr.mxu0 0.0
  %39 = vmatpush1.msra.mxu0 0.0
  %40 = vmatprep.subr.mxu0 0.0
  %41 = vmatpush1.msra.mxu0 0.0
  %42 = vmatprep.subr.mxu0 0.0
  %43 = vmatpush1.msra.mxu0 0.0
  %44 = vmatprep.subr.mxu0 0.0
  %45 = vmatpush1.msra.mxu0 0.0
  %46 = vmatprep.subr.mxu0 0.0
  %47 = vmatpush1.msra.mxu0 0.0
  %48 = vmatprep.subr.mxu0 0.0
  %49 = vmatpush1.msra.mxu0 0.0
  %50 = vmatprep.subr.mxu0 0.0
  %51 = vmatpush1.msra.mxu0 0.0
  %52 = vmatprep.subr.mxu0 0.0
  %53 = vmatpush1.msra.mxu0 0.0
  %54 = vmatprep.subr.mxu0 0.0
  %55 = vmatpush1.msra.mxu0 0.0
  %56 = vmatprep.subr.mxu0 0.0
  %57 = vmatpush1.msra.mxu0 %v20
  %58 = vmatprep.subr.mxu0 0.0
  %59 = vmatpush1.msra.mxu0 %v19
  %60 = vmatprep.subr.mxu0 0.0
  %61 = vmatpush2.msra.mxu0 0.0
  %62 = vmatprep.subr.mxu0 0.0
  %63 = vmatpush2.msra.mxu0 0.0
  %64 = vmatprep.subr.mxu0 0.0
  %65 = vmatpush2.msra.mxu0 0.0
  %66 = vmatprep.subr.mxu0 0.0
  %67 = vmatpush2.msra.mxu0 0.0
  %68 = vmatprep.subr.mxu0 0.0
  %69 = vmatpush2.msra.mxu0 0.0
  %70 = vmatprep.subr.mxu0 0.0
  %71 = vmatpush2.msra.mxu0 0.0
  %72 = vmatprep.subr.mxu0 0.0
  %73 = vmatpush2.msra.mxu0 0.0
  %74 = vmatprep.subr.mxu0 0.0
  %75 = vmatpush2.msra.mxu0 0.0
  %76 = vmatprep.subr.mxu0 0.0
  %77 = vmatpush2.msra.mxu0 0.0
  %78 = vmatprep.subr.mxu0 0.0
  %79 = vmatpush2.msra.mxu0 0.0
  %80 = vmatprep.subr.mxu0 0.0
  %81 = vmatpush2.msra.mxu0 0.0
  %82 = vmatprep.subr.mxu0 0.0
  %83 = vmatpush2.msra.mxu0 0.0
  %84 = vmatprep.subr.mxu0 0.0
  %85 = vmatpush2.msra.mxu0 0.0
  %86 = vmatprep.subr.mxu0 0.0
  %87 = vmatpush2.msra.mxu0 0.0
  %88 = vmatprep.subr.mxu0 0.0
  %89 = vmatpush2.msra.mxu0 0.0
  %90 = vmatprep.subr.mxu0 0.0
  %91 = vmatpush2.msra.mxu0 0.0
  %92 = vmatprep.mubr.f32.mxu0 0.0
  %93 = vmatmul.mubr.f32.gmra.mxu0 %v23
  %v94 = vpop.f32.mrf.mxu0
  %v95 = vadd.f32 0.0, %v94
  %v96 = vpop.f32.mrf.mxu0
  %97 = vmatprep.mubr.f32.mxu0 0.0
  %98 = vmatmul.mubr.f32.gmra.mxu0 %v26
  %v99 = vpop.f32.mrf.mxu0
  %v100 = vadd.f32 0.0, %v99
  %v101 = vpop.f32.mrf.mxu0
  %102 = vdwg.mxu0
  %103 = vxpose.xlu0.b32.start [1/16] %v95, 128
  %104 = vxpose.xlu0.b32.cont [2/16] 0.0, 128
  %105 = vxpose.xlu0.b32.cont [3/16] 0.0, 128
  %106 = vxpose.xlu0.b32.cont [4/16] 0.0, 128
  %107 = vxpose.xlu0.b32.cont [5/16] 0.0, 128
  %108 = vxpose.xlu0.b32.cont [6/16] 0.0, 128
  %109 = vxpose.xlu0.b32.cont [7/16] 0.0, 128
  %110 = vxpose.xlu0.b32.cont [8/16] 0.0, 128
  %111 = vxpose.xlu0.b32.cont [9/16] 0.0, 128
  %112 = vxpose.xlu0.b32.cont [10/16] 0.0, 128
  %113 = vxpose.xlu0.b32.cont [11/16] 0.0, 128
  %114 = vxpose.xlu0.b32.cont [12/16] 0.0, 128
  %115 = vxpose.xlu0.b32.cont [13/16] 0.0, 128
  %116 = vxpose.xlu0.b32.cont [14/16] 0.0, 128
  %117 = vxpose.xlu0.b32.cont [15/16] 0.0, 128
  %118 = vxpose.xlu0.b32.end [16/16] 0.0, 128
  %v119 = vpop.trf.xlu0
  %v120 = vpop.trf.xlu0
  %v121 = vpop.trf.xlu0
  %v122 = vpop.trf.xlu0
  %v123 = vpop.trf.xlu0
  %v124 = vpop.trf.xlu0
  %v125 = vpop.trf.xlu0
  %v126 = vpop.trf.xlu0
  %v127 = vpop.trf.xlu0
  %v128 = vpop.trf.xlu0
  %v129 = vpop.trf.xlu0
  %v130 = vpop.trf.xlu0
  %v131 = vpop.trf.xlu0
  %v132 = vpop.trf.xlu0
  %v133 = vpop.trf.xlu0
  %v134 = vpop.trf.xlu0
  %136 = vrot.lane.b32.xlu0 %v95, 112
  %v137 = vpop.permute.xlu0 %136
  %vm139 = vcmask 64512
  %v141 = vsel %vm139, %v119, 0
  %v144 = vsel %vm139, %v120, 0
  %146 = vmatprep.subr.mxu0 0.0
  %147 = vmatpush1.msra.mxu0 0.0
  %148 = vmatprep.subr.mxu0 0.0
  %149 = vmatpush1.msra.mxu0 0.0
  %150 = vmatprep.subr.mxu0 0.0
  %151 = vmatpush1.msra.mxu0 0.0
  %152 = vmatprep.subr.mxu0 0.0
  %153 = vmatpush1.msra.mxu0 0.0
  %154 = vmatprep.subr.mxu0 0.0
  %155 = vmatpush1.msra.mxu0 0.0
  %156 = vmatprep.subr.mxu0 0.0
  %157 = vmatpush1.msra.mxu0 0.0
  %158 = vmatprep.subr.mxu0 0.0
  %159 = vmatpush1.msra.mxu0 0.0
  %160 = vmatprep.subr.mxu0 0.0
  %161 = vmatpush1.msra.mxu0 0.0
  %162 = vmatprep.subr.mxu0 0.0
  %163 = vmatpush1.msra.mxu0 0.0
  %164 = vmatprep.subr.mxu0 0.0
  %165 = vmatpush1.msra.mxu0 0.0
  %166 = vmatprep.subr.mxu0 0.0
  %167 = vmatpush1.msra.mxu0 0.0
  %168 = vmatprep.subr.mxu0 0.0
  %169 = vmatpush1.msra.mxu0 0.0
  %170 = vmatprep.subr.mxu0 0.0
  %171 = vmatpush1.msra.mxu0 0.0
  %172 = vmatprep.subr.mxu0 0.0
  %173 = vmatpush1.msra.mxu0 0.0
  %174 = vmatprep.subr.mxu0 0.0
  %175 = vmatpush1.msra.mxu0 0.0
  %176 = vmatprep.subr.mxu0 0.0
  %177 = vmatpush1.msra.mxu0 %v137
  %178 = vmatprep.subr.mxu0 0.0
  %179 = vmatpush2.msra.mxu0 0.0
  %180 = vmatprep.subr.mxu0 0.0
  %181 = vmatpush2.msra.mxu0 0.0
  %182 = vmatprep.subr.mxu0 0.0
  %183 = vmatpush2.msra.mxu0 0.0
  %184 = vmatprep.subr.mxu0 0.0
  %185 = vmatpush2.msra.mxu0 0.0
  %186 = vmatprep.subr.mxu0 0.0
  %187 = vmatpush2.msra.mxu0 0.0
  %188 = vmatprep.subr.mxu0 0.0
  %189 = vmatpush2.msra.mxu0 0.0
  %190 = vmatprep.subr.mxu0 0.0
  %191 = vmatpush2.msra.mxu0 0.0
  %192 = vmatprep.subr.mxu0 0.0
  %193 = vmatpush2.msra.mxu0 0.0
  %194 = vmatprep.subr.mxu0 0.0
  %195 = vmatpush2.msra.mxu0 0.0
  %196 = vmatprep.subr.mxu0 0.0
  %197 = vmatpush2.msra.mxu0 0.0
  %198 = vmatprep.subr.mxu0 0.0
  %199 = vmatpush2.msra.mxu0 0.0
  %200 = vmatprep.subr.mxu0 0.0
  %201 = vmatpush2.msra.mxu0 0.0
  %202 = vmatprep.subr.mxu0 0.0
  %203 = vmatpush2.msra.mxu0 0.0
  %204 = vmatprep.subr.mxu0 0.0
  %205 = vmatpush2.msra.mxu0 0.0
  %206 = vmatprep.subr.mxu0 0.0
  %207 = vmatpush2.msra.mxu0 0.0
  %208 = vmatprep.subr.mxu0 0.0
  %209 = vmatpush2.msra.mxu0 0.0
  %210 = vmatprep.mubr.f32.mxu0 0.0
  %211 = vmatmul.mubr.f32.gmra.mxu0 %v141
  %v212 = vpop.f32.mrf.mxu0
  %v213 = vadd.f32 0.0, %v212
  %v214 = vpop.f32.mrf.mxu0
  %215 = vmatprep.mubr.f32.mxu0 0.0
  %216 = vmatmul.mubr.f32.gmra.mxu0 %v144
  %v217 = vpop.f32.mrf.mxu0
  %v218 = vadd.f32 0.0, %v217
  %v219 = vpop.f32.mrf.mxu0
  %220 = vdwg.mxu0
  %221 = vxpose.xlu0.b32.start [1/16] %v100, 128
  %222 = vxpose.xlu0.b32.cont [2/16] 0.0, 128
  %223 = vxpose.xlu0.b32.cont [3/16] 0.0, 128
  %224 = vxpose.xlu0.b32.cont [4/16] 0.0, 128
  %225 = vxpose.xlu0.b32.cont [5/16] 0.0, 128
  %226 = vxpose.xlu0.b32.cont [6/16] 0.0, 128
  %227 = vxpose.xlu0.b32.cont [7/16] 0.0, 128
  %228 = vxpose.xlu0.b32.cont [8/16] 0.0, 128
  %229 = vxpose.xlu0.b32.cont [9/16] 0.0, 128
  %230 = vxpose.xlu0.b32.cont [10/16] 0.0, 128
  %231 = vxpose.xlu0.b32.cont [11/16] 0.0, 128
  %232 = vxpose.xlu0.b32.cont [12/16] 0.0, 128
  %233 = vxpose.xlu0.b32.cont [13/16] 0.0, 128
  %234 = vxpose.xlu0.b32.cont [14/16] 0.0, 128
  %235 = vxpose.xlu0.b32.cont [15/16] 0.0, 128
  %236 = vxpose.xlu0.b32.end [16/16] 0.0, 128
  %v237 = vpop.trf.xlu0
  %v238 = vpop.trf.xlu0
  %v239 = vpop.trf.xlu0
  %v240 = vpop.trf.xlu0
  %v241 = vpop.trf.xlu0
  %v242 = vpop.trf.xlu0
  %v243 = vpop.trf.xlu0
  %v244 = vpop.trf.xlu0
  %v245 = vpop.trf.xlu0
  %v246 = vpop.trf.xlu0
  %v247 = vpop.trf.xlu0
  %v248 = vpop.trf.xlu0
  %v249 = vpop.trf.xlu0
  %v250 = vpop.trf.xlu0
  %v251 = vpop.trf.xlu0
  %v252 = vpop.trf.xlu0
  %254 = vrot.lane.b32.xlu0 %v100, 112
  %v255 = vpop.permute.xlu0 %254
  %v258 = vsel %vm139, %v237, 0
  %v261 = vsel %vm139, %v238, 0
  %263 = vmatprep.subr.mxu0 0.0
  %264 = vmatpush1.msra.mxu0 0.0
  %265 = vmatprep.subr.mxu0 0.0
  %266 = vmatpush1.msra.mxu0 0.0
  %267 = vmatprep.subr.mxu0 0.0
  %268 = vmatpush1.msra.mxu0 0.0
  %269 = vmatprep.subr.mxu0 0.0
  %270 = vmatpush1.msra.mxu0 0.0
  %271 = vmatprep.subr.mxu0 0.0
  %272 = vmatpush1.msra.mxu0 0.0
  %273 = vmatprep.subr.mxu0 0.0
  %274 = vmatpush1.msra.mxu0 0.0
  %275 = vmatprep.subr.mxu0 0.0
  %276 = vmatpush1.msra.mxu0 0.0
  %277 = vmatprep.subr.mxu0 0.0
  %278 = vmatpush1.msra.mxu0 0.0
  %279 = vmatprep.subr.mxu0 0.0
  %280 = vmatpush1.msra.mxu0 0.0
  %281 = vmatprep.subr.mxu0 0.0
  %282 = vmatpush1.msra.mxu0 0.0
  %283 = vmatprep.subr.mxu0 0.0
  %284 = vmatpush1.msra.mxu0 0.0
  %285 = vmatprep.subr.mxu0 0.0
  %286 = vmatpush1.msra.mxu0 0.0
  %287 = vmatprep.subr.mxu0 0.0
  %288 = vmatpush1.msra.mxu0 0.0
  %289 = vmatprep.subr.mxu0 0.0
  %290 = vmatpush1.msra.mxu0 0.0
  %291 = vmatprep.subr.mxu0 0.0
  %292 = vmatpush1.msra.mxu0 0.0
  %293 = vmatprep.subr.mxu0 0.0
  %294 = vmatpush1.msra.mxu0 %v255
  %295 = vmatprep.subr.mxu0 0.0
  %296 = vmatpush2.msra.mxu0 0.0
  %297 = vmatprep.subr.mxu0 0.0
  %298 = vmatpush2.msra.mxu0 0.0
  %299 = vmatprep.subr.mxu0 0.0
  %300 = vmatpush2.msra.mxu0 0.0
  %301 = vmatprep.subr.mxu0 0.0
  %302 = vmatpush2.msra.mxu0 0.0
  %303 = vmatprep.subr.mxu0 0.0
  %304 = vmatpush2.msra.mxu0 0.0
  %305 = vmatprep.subr.mxu0 0.0
  %306 = vmatpush2.msra.mxu0 0.0
  %307 = vmatprep.subr.mxu0 0.0
  %308 = vmatpush2.msra.mxu0 0.0
  %309 = vmatprep.subr.mxu0 0.0
  %310 = vmatpush2.msra.mxu0 0.0
  %311 = vmatprep.subr.mxu0 0.0
  %312 = vmatpush2.msra.mxu0 0.0
  %313 = vmatprep.subr.mxu0 0.0
  %314 = vmatpush2.msra.mxu0 0.0
  %315 = vmatprep.subr.mxu0 0.0
  %316 = vmatpush2.msra.mxu0 0.0
  %317 = vmatprep.subr.mxu0 0.0
  %318 = vmatpush2.msra.mxu0 0.0
  %319 = vmatprep.subr.mxu0 0.0
  %320 = vmatpush2.msra.mxu0 0.0
  %321 = vmatprep.subr.mxu0 0.0
  %322 = vmatpush2.msra.mxu0 0.0
  %323 = vmatprep.subr.mxu0 0.0
  %324 = vmatpush2.msra.mxu0 0.0
  %325 = vmatprep.subr.mxu0 0.0
  %326 = vmatpush2.msra.mxu0 0.0
  %327 = vmatprep.mubr.f32.mxu0 0.0
  %328 = vmatmul.mubr.f32.gmra.mxu0 %v258
  %v329 = vpop.f32.mrf.mxu0
  %v330 = vadd.f32 0.0, %v329
  %v331 = vpop.f32.mrf.mxu0
  %332 = vmatprep.mubr.f32.mxu0 0.0
  %333 = vmatmul.mubr.f32.gmra.mxu0 %v261
  %v334 = vpop.f32.mrf.mxu0
  %v335 = vadd.f32 0.0, %v334
  %v336 = vpop.f32.mrf.mxu0
  %337 = vdwg.mxu0
  %v338 = vmul.f32 %v213, 0.25
  %v339 = vmul.f32 %v218, 0.25
  %v340 = vmul.f32 %v330, 0.25
  %v341 = vmul.f32 %v335, 0.25
  %v342 = vsel %vm21, %v338, -inf
  %343 = vmax.xlane.f32.xlu0 %v342
  %v344 = vpop.xlane.xlu0 %343
  %v345 = vsel %vm21, %v339, -inf
  %346 = vmax.xlane.f32.xlu0 %v345
  %v347 = vpop.xlane.xlu0 %346
  %v348 = vsel %vm21, %v340, -inf
  %349 = vmax.xlane.f32.xlu0 %v348
  %v350 = vpop.xlane.xlu0 %349
  %v351 = vsel %vm21, %v341, -inf
  %352 = vmax.xlane.f32.xlu0 %v351
  %v353 = vpop.xlane.xlu0 %352
  %v354 = vsub.f32 %v338, %v344
  %v355 = vsub.f32 %v339, %v347
  %v356 = vsub.f32 %v340, %v350
  %v357 = vsub.f32 %v341, %v353
  %v358 = vmul.f32 %v354, 1.442695
  %v359 = vpow.pop %v358
  %v360 = vmul.f32 %v355, 1.442695
  %v361 = vpow.pop %v360
  %v362 = vmul.f32 %v356, 1.442695
  %v363 = vpow.pop %v362
  %v364 = vmul.f32 %v357, 1.442695
  %v365 = vpow.pop %v364
  %v366 = vsel %vm21, %v359, 0.0
  %367 = vadd.xlane.f32.xlu0 %v366
  %v368 = vpop.xlane.xlu0 %367
  %v369 = vsel %vm21, %v361, 0.0
  %370 = vadd.xlane.f32.xlu0 %v369
  %v371 = vpop.xlane.xlu0 %370
  %v372 = vsel %vm21, %v363, 0.0
  %373 = vadd.xlane.f32.xlu0 %v372
  %v374 = vpop.xlane.xlu0 %373
  %v375 = vsel %vm21, %v365, 0.0
  %376 = vadd.xlane.f32.xlu0 %v375
  %v377 = vpop.xlane.xlu0 %376
  %v378 = vrcp.pop %v368
  %v379 = vrcp.pop %v371
  %v380 = vrcp.pop %v374
  %v381 = vrcp.pop %v377
  %v382 = vmul.f32 %v359, %v378
  %v383 = vmul.f32 %v361, %v379
  %v384 = vmul.f32 %v363, %v380
  %v385 = vmul.f32 %v365, %v381
  %386 = vrot.lane.b32.xlu0 %v95, 96
  %v387 = vpop.permute.xlu0 %386
  %v388 = vsel %vm21, %v387, 0
  %v391 = vsel %vm21, %v382, 0
  %v394 = vsel %vm21, %v383, 0
  %396 = vmatprep.subr.mxu0 0.0
  %397 = vmatpush1.xpose.msra.mxu0 0.0
  %398 = vmatprep.subr.mxu0 0.0
  %399 = vmatpush1.xpose.msra.mxu0 0.0
  %400 = vmatprep.subr.mxu0 0.0
  %401 = vmatpush1.xpose.msra.mxu0 0.0
  %402 = vmatprep.subr.mxu0 0.0
  %403 = vmatpush1.xpose.msra.mxu0 0.0
  %404 = vmatprep.subr.mxu0 0.0
  %405 = vmatpush1.xpose.msra.mxu0 0.0
  %406 = vmatprep.subr.mxu0 0.0
  %407 = vmatpush1.xpose.msra.mxu0 0.0
  %408 = vmatprep.subr.mxu0 0.0
  %409 = vmatpush1.xpose.msra.mxu0 0.0
  %410 = vmatprep.subr.mxu0 0.0
  %411 = vmatpush1.xpose.msra.mxu0 0.0
  %412 = vmatprep.subr.mxu0 0.0
  %413 = vmatpush1.xpose.msra.mxu0 0.0
  %414 = vmatprep.subr.mxu0 0.0
  %415 = vmatpush1.xpose.msra.mxu0 0.0
  %416 = vmatprep.subr.mxu0 0.0
  %417 = vmatpush1.xpose.msra.mxu0 0.0
  %418 = vmatprep.subr.mxu0 0.0
  %419 = vmatpush1.xpose.msra.mxu0 0.0
  %420 = vmatprep.subr.mxu0 0.0
  %421 = vmatpush1.xpose.msra.mxu0 0.0
  %422 = vmatprep.subr.mxu0 0.0
  %423 = vmatpush1.xpose.msra.mxu0 0.0
  %424 = vmatprep.subr.mxu0 0.0
  %425 = vmatpush1.xpose.msra.mxu0 %v394
  %426 = vmatprep.subr.mxu0 0.0
  %427 = vmatpush1.xpose.msra.mxu0 %v391
  %428 = vmatprep.subr.mxu0 0.0
  %429 = vmatpush2.xpose.msra.mxu0 0.0
  %430 = vmatprep.subr.mxu0 0.0
  %431 = vmatpush2.xpose.msra.mxu0 0.0
  %432 = vmatprep.subr.mxu0 0.0
  %433 = vmatpush2.xpose.msra.mxu0 0.0
  %434 = vmatprep.subr.mxu0 0.0
  %435 = vmatpush2.xpose.msra.mxu0 0.0
  %436 = vmatprep.subr.mxu0 0.0
  %437 = vmatpush2.xpose.msra.mxu0 0.0
  %438 = vmatprep.subr.mxu0 0.0
  %439 = vmatpush2.xpose.msra.mxu0 0.0
  %440 = vmatprep.subr.mxu0 0.0
  %441 = vmatpush2.xpose.msra.mxu0 0.0
  %442 = vmatprep.subr.mxu0 0.0
  %443 = vmatpush2.xpose.msra.mxu0 0.0
  %444 = vmatprep.subr.mxu0 0.0
  %445 = vmatpush2.xpose.msra.mxu0 0.0
  %446 = vmatprep.subr.mxu0 0.0
  %447 = vmatpush2.xpose.msra.mxu0 0.0
  %448 = vmatprep.subr.mxu0 0.0
  %449 = vmatpush2.xpose.msra.mxu0 0.0
  %450 = vmatprep.subr.mxu0 0.0
  %451 = vmatpush2.xpose.msra.mxu0 0.0
  %452 = vmatprep.subr.mxu0 0.0
  %453 = vmatpush2.xpose.msra.mxu0 0.0
  %454 = vmatprep.subr.mxu0 0.0
  %455 = vmatpush2.xpose.msra.mxu0 0.0
  %456 = vmatprep.subr.mxu0 0.0
  %457 = vmatpush2.xpose.msra.mxu0 0.0
  %458 = vmatprep.subr.mxu0 0.0
  %459 = vmatpush2.xpose.msra.mxu0 0.0
  %460 = vmatprep.mubr.f32.mxu0 0.0
  %461 = vmatmul.mubr.f32.gmra.mxu0 %v388
  %v462 = vpop.f32.mrf.mxu0
  %v463 = vadd.f32 0.0, %v462
  %v464 = vpop.f32.mrf.mxu0
  %465 = vdwg.mxu0
  %466 = vrot.lane.b32.xlu0 %v100, 96
  %v467 = vpop.permute.xlu0 %466
  %v468 = vsel %vm21, %v467, 0
  %v471 = vsel %vm21, %v384, 0
  %v474 = vsel %vm21, %v385, 0
  %476 = vmatprep.subr.mxu0 0.0
  %477 = vmatpush1.xpose.msra.mxu0 0.0
  %478 = vmatprep.subr.mxu0 0.0
  %479 = vmatpush1.xpose.msra.mxu0 0.0
  %480 = vmatprep.subr.mxu0 0.0
  %481 = vmatpush1.xpose.msra.mxu0 0.0
  %482 = vmatprep.subr.mxu0 0.0
  %483 = vmatpush1.xpose.msra.mxu0 0.0
  %484 = vmatprep.subr.mxu0 0.0
  %485 = vmatpush1.xpose.msra.mxu0 0.0
  %486 = vmatprep.subr.mxu0 0.0
  %487 = vmatpush1.xpose.msra.mxu0 0.0
  %488 = vmatprep.subr.mxu0 0.0
  %489 = vmatpush1.xpose.msra.mxu0 0.0
  %490 = vmatprep.subr.mxu0 0.0
  %491 = vmatpush1.xpose.msra.mxu0 0.0
  %492 = vmatprep.subr.mxu0 0.0
  %493 = vmatpush1.xpose.msra.mxu0 0.0
  %494 = vmatprep.subr.mxu0 0.0
  %495 = vmatpush1.xpose.msra.mxu0 0.0
  %496 = vmatprep.subr.mxu0 0.0
  %497 = vmatpush1.xpose.msra.mxu0 0.0
  %498 = vmatprep.subr.mxu0 0.0
  %499 = vmatpush1.xpose.msra.mxu0 0.0
  %500 = vmatprep.subr.mxu0 0.0
  %501 = vmatpush1.xpose.msra.mxu0 0.0
  %502 = vmatprep.subr.mxu0 0.0
  %503 = vmatpush1.xpose.msra.mxu0 0.0
  %504 = vmatprep.subr.mxu0 0.0
  %505 = vmatpush1.xpose.msra.mxu0 %v474
  %506 = vmatprep.subr.mxu0 0.0
  %507 = vmatpush1.xpose.msra.mxu0 %v471
  %508 = vmatprep.subr.mxu0 0.0
  %509 = vmatpush2.xpose.msra.mxu0 0.0
  %510 = vmatprep.subr.mxu0 0.0
  %511 = vmatpush2.xpose.msra.mxu0 0.0
  %512 = vmatprep.subr.mxu0 0.0
  %513 = vmatpush2.xpose.msra.mxu0 0.0
  %514 = vmatprep.subr.mxu0 0.0
  %515 = vmatpush2.xpose.msra.mxu0 0.0
  %516 = vmatprep.subr.mxu0 0.0
  %517 = vmatpush2.xpose.msra.mxu0 0.0
  %518 = vmatprep.subr.mxu0 0.0
  %519 = vmatpush2.xpose.msra.mxu0 0.0
  %520 = vmatprep.subr.mxu0 0.0
  %521 = vmatpush2.xpose.msra.mxu0 0.0
  %522 = vmatprep.subr.mxu0 0.0
  %523 = vmatpush2.xpose.msra.mxu0 0.0
  %524 = vmatprep.subr.mxu0 0.0
  %525 = vmatpush2.xpose.msra.mxu0 0.0
  %526 = vmatprep.subr.mxu0 0.0
  %527 = vmatpush2.xpose.msra.mxu0 0.0
  %528 = vmatprep.subr.mxu0 0.0
  %529 = vmatpush2.xpose.msra.mxu0 0.0
  %530 = vmatprep.subr.mxu0 0.0
  %531 = vmatpush2.xpose.msra.mxu0 0.0
  %532 = vmatprep.subr.mxu0 0.0
  %533 = vmatpush2.xpose.msra.mxu0 0.0
  %534 = vmatprep.subr.mxu0 0.0
  %535 = vmatpush2.xpose.msra.mxu0 0.0
  %536 = vmatprep.subr.mxu0 0.0
  %537 = vmatpush2.xpose.msra.mxu0 0.0
  %538 = vmatprep.subr.mxu0 0.0
  %539 = vmatpush2.xpose.msra.mxu0 0.0
  %540 = vmatprep.mubr.f32.mxu0 0.0
  %541 = vmatmul.mubr.f32.gmra.mxu0 %v468
  %v542 = vpop.f32.mrf.mxu0
  %v543 = vadd.f32 0.0, %v542
  %v544 = vpop.f32.mrf.mxu0
  %545 = vdwg.mxu0
  %v546 = vld [vmem:[%s2] sm:$0xff]
  %v547 = vld [vmem:[%s2 + $0x8] sm:$0xff]
  %v548 = vld [vmem:[%s3] sm:$0x1]
  %v550 = vlaneseq
  %v551 = vshrl.u32 %v550, 7
  %v552 = vsub.s32 0, %v551
  %v553 = vrot.slane %v548, %v552
  %v556 = vsel %vm21, %v463, 0
  %v559 = vsel %vm21, %v543, 0
  %561 = vmatprep.subr.mxu0 0.0
  %562 = vmatpush1.msra.mxu0 0.0
  %563 = vmatprep.subr.mxu0 0.0
  %564 = vmatpush1.msra.mxu0 0.0
  %565 = vmatprep.subr.mxu0 0.0
  %566 = vmatpush1.msra.mxu0 0.0
  %567 = vmatprep.subr.mxu0 0.0
  %568 = vmatpush1.msra.mxu0 0.0
  %569 = vmatprep.subr.mxu0 0.0
  %570 = vmatpush1.msra.mxu0 0.0
  %571 = vmatprep.subr.mxu0 0.0
  %572 = vmatpush1.msra.mxu0 0.0
  %573 = vmatprep.subr.mxu0 0.0
  %574 = vmatpush1.msra.mxu0 0.0
  %575 = vmatprep.subr.mxu0 0.0
  %576 = vmatpush1.msra.mxu0 0.0
  %577 = vmatprep.subr.mxu0 0.0
  %578 = vmatpush1.msra.mxu0 0.0
  %579 = vmatprep.subr.mxu0 0.0
  %580 = vmatpush1.msra.mxu0 0.0
  %581 = vmatprep.subr.mxu0 0.0
  %582 = vmatpush1.msra.mxu0 0.0
  %583 = vmatprep.subr.mxu0 0.0
  %584 = vmatpush1.msra.mxu0 0.0
  %585 = vmatprep.subr.mxu0 0.0
  %586 = vmatpush1.msra.mxu0 0.0
  %587 = vmatprep.subr.mxu0 0.0
  %588 = vmatpush1.msra.mxu0 0.0
  %589 = vmatprep.subr.mxu0 0.0
  %590 = vmatpush1.msra.mxu0 %v547
  %591 = vmatprep.subr.mxu0 0.0
  %592 = vmatpush1.msra.mxu0 %v546
  %593 = vmatprep.subr.mxu0 0.0
  %594 = vmatpush2.msra.mxu0 0.0
  %595 = vmatprep.subr.mxu0 0.0
  %596 = vmatpush2.msra.mxu0 0.0
  %597 = vmatprep.subr.mxu0 0.0
  %598 = vmatpush2.msra.mxu0 0.0
  %599 = vmatprep.subr.mxu0 0.0
  %600 = vmatpush2.msra.mxu0 0.0
  %601 = vmatprep.subr.mxu0 0.0
  %602 = vmatpush2.msra.mxu0 0.0
  %603 = vmatprep.subr.mxu0 0.0
  %604 = vmatpush2.msra.mxu0 0.0
  %605 = vmatprep.subr.mxu0 0.0
  %606 = vmatpush2.msra.mxu0 0.0
  %607 = vmatprep.subr.mxu0 0.0
  %608 = vmatpush2.msra.mxu0 0.0
  %609 = vmatprep.subr.mxu0 0.0
  %610 = vmatpush2.msra.mxu0 0.0
  %611 = vmatprep.subr.mxu0 0.0
  %612 = vmatpush2.msra.mxu0 0.0
  %613 = vmatprep.subr.mxu0 0.0
  %614 = vmatpush2.msra.mxu0 0.0
  %615 = vmatprep.subr.mxu0 0.0
  %616 = vmatpush2.msra.mxu0 0.0
  %617 = vmatprep.subr.mxu0 0.0
  %618 = vmatpush2.msra.mxu0 0.0
  %619 = vmatprep.subr.mxu0 0.0
  %620 = vmatpush2.msra.mxu0 0.0
  %621 = vmatprep.subr.mxu0 0.0
  %622 = vmatpush2.msra.mxu0 0.0
  %623 = vmatprep.subr.mxu0 0.0
  %624 = vmatpush2.msra.mxu0 0.0
  %625 = vmatprep.mubr.f32.mxu0 0.0
  %626 = vmatmul.mubr.f32.gmra.mxu0 %v556
  %v627 = vpop.f32.mrf.mxu0
  %v628 = vadd.f32 %v553, %v627
  %v629 = vpop.f32.mrf.mxu0
  %630 = vmatprep.mubr.f32.mxu0 0.0
  %631 = vmatmul.mubr.f32.gmra.mxu0 %v559
  %v632 = vpop.f32.mrf.mxu0
  %v633 = vadd.f32 %v553, %v632
  %v634 = vpop.f32.mrf.mxu0
  %635 = vdwg.mxu0
  %v638 = vrot.slane %v633, 7
  %vm639 = vcmask 1041409
  %v640 = vsel %vm639, %v638, %v628
  %v642 = vrot.slane %v628, 1
  %v643 = vsel %vm639, %v633, %v642
  %644 = vrot.lane.b32.xlu0 %v643, 16
  %v645 = vpop.permute.xlu0 %644
  %v647 = vrot.slane %v628, 2
  %v648 = vrot.slane %v633, 1
  %v649 = vsel %vm639, %v648, %v647
  %650 = vrot.lane.b32.xlu0 %v649, 32
  %v651 = vpop.permute.xlu0 %650
  %v653 = vrot.slane %v628, 3
  %v654 = vrot.slane %v633, 2
  %v655 = vsel %vm639, %v654, %v653
  %656 = vrot.lane.b32.xlu0 %v655, 48
  %v657 = vpop.permute.xlu0 %656
  %v659 = vrot.slane %v628, 4
  %v660 = vrot.slane %v633, 3
  %v661 = vsel %vm639, %v660, %v659
  %662 = vrot.lane.b32.xlu0 %v661, 64
  %v663 = vpop.permute.xlu0 %662
  %v665 = vrot.slane %v628, 5
  %v666 = vrot.slane %v633, 4
  %v667 = vsel %vm639, %v666, %v665
  %668 = vrot.lane.b32.xlu0 %v667, 80
  %v669 = vpop.permute.xlu0 %668
  %v671 = vrot.slane %v628, 6
  %v672 = vrot.slane %v633, 5
  %v673 = vsel %vm639, %v672, %v671
  %674 = vrot.lane.b32.xlu0 %v673, 96
  %v675 = vpop.permute.xlu0 %674
  %v677 = vrot.slane %v628, 7
  %v678 = vrot.slane %v633, 6
  %v679 = vsel %vm639, %v678, %v677
  %680 = vrot.lane.b32.xlu0 %v679, 112
  %v681 = vpop.permute.xlu0 %680
  %v683 = vsel %vm21, %v640, %v645
  %vm684 = vcmask 261120
  %v685 = vsel %vm684, %v683, %v651
  %vm686 = vcmask 392192
  %v687 = vsel %vm686, %v685, %v657
  %vm688 = vcmask 523264
  %v689 = vsel %vm688, %v687, %v663
  %vm690 = vcmask 654336
  %v691 = vsel %vm690, %v689, %v669
  %vm692 = vcmask 785408
  %v693 = vsel %vm692, %v691, %v675
  %vm694 = vcmask 916480
  %v695 = vsel %vm694, %v693, %v681
  %696 = vst [vmem:[%s4] sm:$0x3] %v695
  // Predicated region
  $region18: #{spatial_attention.1} parent=0 // pred_check
    _
  $region19: #{spatial_attention.1} parent=0 // pred_check_branch
    %698 = sbr.rel (0) target = $region21
  $region20: #{spatial_attention.1} parent=0 // pred_region
    _
  $region21: #{spatial_attention.1} parent=0 // pred_fallthru
    _
  // Predicated region
  $region22: #{spatial_attention.1} parent=0 // pred_check
    _
  $region23: #{spatial_attention.1} parent=0 // pred_check_branch
    %700 = sbr.rel (0) target = $region25
  $region24: #{spatial_attention.1} parent=0 // pred_region
    _
  $region25: #{spatial_attention.1} parent=0 // pred_fallthru
    _

</llo_original>
